<compile_context>
chip_gen: v7x
topology: tpu7x:2x2x1
jax: 0.10.0
libtpu: 0.0.40
codegen_flags: <defaults>
</compile_context>

<pallas_src>
import functools

import jax
import jax.numpy as jnp
from jax.experimental import pallas as pl
from jax.experimental.pallas import tpu as pltpu

M_MARGIN = 0.2
S_SCALE = 10.0


def _round_up(x, m):
    return ((x + m - 1) // m) * m


def _margin_loss_kernel(x_ref, tgt_ref, out_ref, *, n_rows, margin, tiles_per_half):
    # x_ref:   (TILE_N, C) logits block (input dtype), VMEM
    # tgt_ref: (TILE_N, 1) int32 class ids block, VMEM
    # out_ref: (1, 1, 1) f32 per-half partial sum (resident across the tile axis)
    p = pl.program_id(0)          # half-batch axis ("parallel": one per TensorCore on v7x)
    i = pl.program_id(1)          # row-tile axis within the half ("arbitrary" reduction)

    @pl.when(i == 0)
    def _():
        out_ref[...] = jnp.zeros_like(out_ref)

    x = x_ref[...].astype(jnp.float32)              # upcast right after load (bf16-friendly)
    tgt = tgt_ref[...]                              # (TILE_N, 1) int32
    tn, c = x.shape

    # boolean one-hot mask via lane iota (== scatter_(1, target, 1)); never materialized as f32
    col = jax.lax.broadcasted_iota(jnp.int32, (tn, c), 1)
    mask = col == tgt                               # (TILE_N, C) bool

    # fused margin: adj == where(one_hot, x - m*s, x)
    adj = jnp.where(mask, x - margin, x)

    # numerically stable cross entropy: lse(adj) - adj[target]
    row_max = jnp.max(adj, axis=1, keepdims=True)                               # (TILE_N, 1)
    lse = jnp.log(jnp.sum(jnp.exp(adj - row_max), axis=1, keepdims=True)) + row_max
    tgt_logit = jnp.sum(jnp.where(mask, adj, 0.0), axis=1, keepdims=True)       # adj[target]
    per_row = lse - tgt_logit                                                   # (TILE_N, 1)

    # mask rows past the real batch: ragged last tile and clamped overhang blocks.
    # (NaN/Inf coming from Pallas-padded rows do not propagate through jnp.where.)
    row0 = (p * tiles_per_half + i) * tn
    row = jax.lax.broadcasted_iota(jnp.int32, (tn, 1), 0) + row0
    per_row = jnp.where(row < n_rows, per_row, 0.0)

    out_ref[...] += jnp.sum(per_row).reshape(1, 1, 1)


def _pick_tile_n(n, c, itemsize, vmem_cap):
    """Pick a row tile from an honest VMEM budget (double-buffered logits + targets)."""
    if n <= 8:
        return n
    # Generation-aware budget for the streamed blocks: ~24 MiB on v5e/v6e (128 MiB VMEM),
    # ~21 MiB on v7x (64 MiB VMEM) -> always comfortable headroom.
    budget = min(vmem_cap // 3, 24 * 1024 * 1024)
    c_pad = _round_up(c, 128)
    # per-row VMEM footprint: logits (2 pipeline buffers) + int32 targets padded to 128 lanes (2 buffers)
    per_row = c_pad * itemsize * 2 + 128 * 4 * 2
    t_vmem = budget // per_row
    # also target ~4 MiB of *real* logit data per block (amortizes the ~0.35 us/step overhead)
    t_data = max(1, (4 * 1024 * 1024) // max(c * itemsize, 1))
    t = min(t_vmem, t_data, n)
    t = max(8, (t // 8) * 8)                        # f32 sublane floor, sublane-aligned
    return t


def margin_loss(x, target, *, m=M_MARGIN, s=S_SCALE, tile_n=None):
    """x: [N, C] float (f32/bf16) logits; target: [N] int class ids. Returns f32 scalar."""
    n, c = x.shape
    itemsize = jnp.dtype(x.dtype).itemsize
    tgt2d = target.astype(jnp.int32).reshape(n, 1)

    try:
        vmem_cap = int(pltpu.get_tpu_info().vmem_capacity_bytes)
    except Exception:  # pragma: no cover - fall back to the smallest per-core VMEM (v7x)
        vmem_cap = 64 * 1024 * 1024

    if tile_n is None:
        tile_n = _pick_tile_n(n, c, itemsize, vmem_cap)
    tile_n = int(tile_n)

    total_tiles = pl.cdiv(n, tile_n)
    num_halves = 2 if total_tiles >= 2 else 1       # half-batch split -> both v7x TensorCores
    tiles_per_half = pl.cdiv(total_tiles, num_halves)
    last_block = total_tiles - 1

    def row_block(p, i):
        # clamp overhang steps of the second half onto the last real block (rows get masked)
        return (jnp.minimum(p * tiles_per_half + i, last_block), 0)

    # explicit VMEM limit covering the double-buffered streams + headroom
    c_pad = _round_up(c, 128)
    stream_bytes = tile_n * c_pad * itemsize * 2 + tile_n * 128 * 4 * 2
    vmem_limit = int(min(vmem_cap - 8 * 1024 * 1024,
                         max(32 * 1024 * 1024, stream_bytes + 16 * 1024 * 1024)))

    kernel = functools.partial(
        _margin_loss_kernel, n_rows=n, margin=float(m * s), tiles_per_half=tiles_per_half)

    partial_sums = pl.pallas_call(
        kernel,
        out_shape=jax.ShapeDtypeStruct((num_halves, 1, 1), jnp.float32),
        grid=(num_halves, tiles_per_half),
        in_specs=[
            pl.BlockSpec((tile_n, c), row_block),
            pl.BlockSpec((tile_n, 1), row_block),
        ],
        out_specs=pl.BlockSpec((1, 1, 1), lambda p, i: (p, 0, 0)),
        compiler_params=pltpu.CompilerParams(
            dimension_semantics=("parallel", "arbitrary"),
            vmem_limit_bytes=vmem_limit,
        ),
    )(x, tgt2d)

    # finish the reduction in the wrapper: sum the per-half partials and take the mean
    return jnp.sum(partial_sums) / jnp.float32(n)


def margin_loss_ref(x, target, m=M_MARGIN, s=S_SCALE):
    # pure-JAX reference for verification
    x = x.astype(jnp.float32)
    _, c = x.shape
    one_hot = jax.nn.one_hot(target, c, dtype=jnp.bool_)
    adj = jnp.where(one_hot, x - m * s, x)
    lse = jax.scipy.special.logsumexp(adj, axis=1)
    tgt_logit = jnp.sum(jnp.where(one_hot, adj, 0.0), axis=1)
    return jnp.mean(lse - tgt_logit)


if __name__ == "__main__":
    key = jax.random.PRNGKey(0)
    kx, kt = jax.random.split(key)

    # Case 1: multi-tile + half-batch ("parallel") path with a ragged last tile and a
    # clamped overhang step: N=20, TILE_N=8 -> 3 row tiles split over grid (2, 2).
    n, c = 20, 32
    x = jax.random.normal(kx, (n, c), dtype=jnp.float32)
    target = jax.random.randint(kt, (n,), 0, c, dtype=jnp.int32)
    loss = jax.block_until_ready(margin_loss(x, target, tile_n=8))
    ref = margin_loss_ref(x, target)
    assert jnp.allclose(loss, ref, atol=1e-5, rtol=1e-5), (loss, ref)

    # Case 2: default tile selection (single full block, grid (1, 1)) with bf16 logits.
    xb = x[:8].astype(jnp.bfloat16)
    tb = target[:8]
    loss_b = jax.block_until_ready(margin_loss(xb, tb))
    ref_b = margin_loss_ref(xb, tb)
    assert jnp.allclose(loss_b, ref_b, atol=1e-5, rtol=1e-5), (loss_b, ref_b)

    print("KERNEL_OK")
</pallas_src>

<mosaic_0001>
module attributes {stable_mosaic.version = 11 : i64} {
  func.func @_margin_loss_kernel(%arg0: i32, %arg1: i32, %arg2: memref<8x32xf32, #tpu.memory_space<vmem>>, %arg3: memref<8x1xi32, #tpu.memory_space<vmem>>, %arg4: memref<1x1x1xf32, #tpu.memory_space<vmem>>) attributes {dimension_semantics = [#tpu.dimension_semantics<parallel>, #tpu.dimension_semantics<arbitrary>], iteration_bounds = array<i64: 2, 2>, scalar_prefetch = 0 : i64, scratch_operands = 0 : i64, tpu.core_type = #tpu.core_type<tc>, window_params = [{transform_indices = @transform_0, window_bounds = array<i64: 8, 32>}, {transform_indices = @transform_1, window_bounds = array<i64: 8, 1>}, {transform_indices = @transform_2, window_bounds = array<i64: 1, 1, 1>}]} {
    %c0_i32 = arith.constant 0 : i32
    %0 = arith.cmpi eq, %arg1, %c0_i32 : i32
    %1 = arith.extui %0 : i1 to i32
    %c0_i32_0 = arith.constant 0 : i32
    %2 = arith.cmpi ne, %1, %c0_i32_0 : i32
    scf.if %2 {
      %cst_16 = arith.constant 0.000000e+00 : f32
      %43 = vector.broadcast %cst_16 : f32 to vector<1x1x1xf32>
      %c0_17 = arith.constant 0 : index
      %c0_18 = arith.constant 0 : index
      %c0_19 = arith.constant 0 : index
      %44 = vector.load %arg4[%c0_17, %c0_18, %c0_19] : memref<1x1x1xf32, #tpu.memory_space<vmem>>, vector<1x1x1xf32>
      tpu.vector_store %arg4[%c0_17, %c0_18, %c0_19], %43 {strides = array<i32>} : memref<1x1x1xf32, #tpu.memory_space<vmem>>, vector<1x1x1xf32>,
    } else {
    }
    %c0 = arith.constant 0 : index
    %c0_1 = arith.constant 0 : index
    %3 = vector.load %arg2[%c0, %c0_1] : memref<8x32xf32, #tpu.memory_space<vmem>>, vector<8x32xf32>
    %c0_2 = arith.constant 0 : index
    %c0_3 = arith.constant 0 : index
    %4 = vector.load %arg3[%c0_2, %c0_3] : memref<8x1xi32, #tpu.memory_space<vmem>>, vector<8x1xi32>
    %5 = tpu.iota {dimensions = array<i32: 1>} : vector<8x32xi32>
    %6 = vector.broadcast %4 : vector<8x1xi32> to vector<8x32xi32>
    %7 = arith.cmpi eq, %5, %6 : vector<8x32xi32>
    %cst = arith.constant 2.000000e+00 : f32
    %8 = vector.broadcast %cst : f32 to vector<8x32xf32>
    %9 = arith.subf %3, %8 : vector<8x32xf32>
    %10 = arith.select %7, %9, %3 : vector<8x32xi1>, vector<8x32xf32>
    %cst_4 = arith.constant dense<0xFF800000> : vector<8xf32>
    %11 = vector.multi_reduction <maximumf>, %10, %cst_4 [1] : vector<8x32xf32> to vector<8xf32>
    %12 = vector.shape_cast %11 : vector<8xf32> to vector<8x1xf32>
    %13 = vector.broadcast %12 : vector<8x1xf32> to vector<8x32xf32>
    %14 = arith.subf %10, %13 : vector<8x32xf32>
    %15 = math.exp %14 : vector<8x32xf32>
    %cst_5 = arith.constant dense<0.000000e+00> : vector<8xf32>
    %16 = vector.multi_reduction <add>, %15, %cst_5 [1] : vector<8x32xf32> to vector<8xf32>
    %17 = vector.shape_cast %16 : vector<8xf32> to vector<8x1xf32>
    %18 = math.log %17 : vector<8x1xf32>
    %19 = arith.addf %18, %12 : vector<8x1xf32>
    %cst_6 = arith.constant 0.000000e+00 : f32
    %20 = vector.broadcast %cst_6 : f32 to vector<8x32xf32>
    %21 = arith.select %7, %10, %20 : vector<8x32xi1>, vector<8x32xf32>
    %cst_7 = arith.constant dense<0.000000e+00> : vector<8xf32>
    %22 = vector.multi_reduction <add>, %21, %cst_7 [1] : vector<8x32xf32> to vector<8xf32>
    %23 = vector.shape_cast %22 : vector<8xf32> to vector<8x1xf32>
    %24 = arith.subf %19, %23 : vector<8x1xf32>
    %c2_i32 = arith.constant 2 : i32
    %25 = arith.muli %arg0, %c2_i32 : i32
    %26 = arith.addi %25, %arg1 : i32
    %c8_i32 = arith.constant 8 : i32
    %27 = arith.muli %26, %c8_i32 : i32
    %28 = tpu.iota {dimensions = array<i32: 0>} : vector<8x1xi32>
    %29 = vector.broadcast %27 : i32 to vector<8x1xi32>
    %30 = arith.addi %28, %29 : vector<8x1xi32>
    %c20_i32 = arith.constant 20 : i32
    %31 = vector.broadcast %c20_i32 : i32 to vector<8x1xi32>
    %32 = arith.cmpi slt, %30, %31 : vector<8x1xi32>
    %cst_8 = arith.constant 0.000000e+00 : f32
    %33 = vector.broadcast %cst_8 : f32 to vector<8x1xf32>
    %34 = arith.select %32, %24, %33 : vector<8x1xi1>, vector<8x1xf32>
    %c0_9 = arith.constant 0 : index
    %c0_10 = arith.constant 0 : index
    %c0_11 = arith.constant 0 : index
    %35 = vector.load %arg4[%c0_9, %c0_10, %c0_11] : memref<1x1x1xf32, #tpu.memory_space<vmem>>, vector<1x1x1xf32>
    %36 = vector.shape_cast %34 : vector<8x1xf32> to vector<1x8x1xf32>
    %cst_12 = arith.constant dense<0.000000e+00> : vector<1xf32>
    %37 = vector.multi_reduction <add>, %36, %cst_12 [1, 2] : vector<1x8x1xf32> to vector<1xf32>
    %38 = vector.shape_cast %37 : vector<1xf32> to vector<1x1x1xf32>
    %39 = vector.extract %38[0, 0, 0] : f32 from vector<1x1x1xf32>
    %40 = vector.broadcast %39 : f32 to vector<1x1x1xf32>
    %41 = arith.addf %35, %40 : vector<1x1x1xf32>
    %c0_13 = arith.constant 0 : index
    %c0_14 = arith.constant 0 : index
    %c0_15 = arith.constant 0 : index
    %42 = vector.load %arg4[%c0_13, %c0_14, %c0_15] : memref<1x1x1xf32, #tpu.memory_space<vmem>>, vector<1x1x1xf32>
    tpu.vector_store %arg4[%c0_13, %c0_14, %c0_15], %41 {strides = array<i32>} : memref<1x1x1xf32, #tpu.memory_space<vmem>>, vector<1x1x1xf32>,
    return
  }
  func.func @transform_0(%arg0: i32, %arg1: i32) -> (i32, i32) {
    %c2_i32 = arith.constant 2 : i32
    %0 = arith.muli %arg0, %c2_i32 : i32
    %1 = arith.addi %0, %arg1 : i32
    %c2_i32_0 = arith.constant 2 : i32
    %2 = arith.minsi %1, %c2_i32_0 : i32
    %c0_i32 = arith.constant 0 : i32
    %c0_i32_1 = arith.constant 0 : i32
    return %2, %c0_i32 : i32, i32
  }
  func.func @transform_1(%arg0: i32, %arg1: i32) -> (i32, i32) {
    %c2_i32 = arith.constant 2 : i32
    %0 = arith.muli %arg0, %c2_i32 : i32
    %1 = arith.addi %0, %arg1 : i32
    %c2_i32_0 = arith.constant 2 : i32
    %2 = arith.minsi %1, %c2_i32_0 : i32
    %c0_i32 = arith.constant 0 : i32
    %c0_i32_1 = arith.constant 0 : i32
    return %2, %c0_i32 : i32, i32
  }
  func.func @transform_2(%arg0: i32, %arg1: i32) -> (i32, i32, i32) {
    %c0_i32 = arith.constant 0 : i32
    %c0_i32_0 = arith.constant 0 : i32
    %c0_i32_1 = arith.constant 0 : i32
    return %arg0, %c0_i32, %c0_i32_0 : i32, i32, i32
  }
}

</mosaic_0001>

<llo_original>
// kernel: tpu_custom_call.1
$region0: #{tpu_custom_call.1}
  #allocation0 [shape = 'u32[]', space=smem, size = 0x4, offset = 0x4, fixed_abs, tag = 'smem constant byte address 0x4 - core index']
  #allocation1 [shape = 'u32[144,128]{1,0:T(1,128)}', space=vmem, size = 0x12000, scoped, tag = 'internal scratch']
  %s0 = inlined_call_operand.vmem [shape: f32[20,32], index: 0, kind: input, shape index: {}]
  %s1 = inlined_call_operand.vmem [shape: s32[20,1], index: 1, kind: input, shape index: {}]
  %s2 = inlined_call_operand.vmem [shape: f32[2,1,1], index: 2, kind: output, shape index: {}]
  %s3 = sld [smem:[#allocation0]]
  $region45: #{tpu_custom_call.1} parent=0
    _
  %s5 = ssub.s32 1, %s3
  %s6 = scalar_select 0, %s5, %s3
  loop: start=0, step=1, limit=6
  $region2: #{tpu_custom_call.1} parent=0 // loop_pre_header
    _
  $region3: #{tpu_custom_call.1} parent=0 // loop_header
    %s8 = sphi 0, %s12
    %p9 = scmp.ge.s32.totalorder %s8, 6
    %s15 = sphi 0, %s27
    %s16 = sphi 0, %s23
    %s17 = sphi 0, %s15
    %s18 = sphi 0, %s16
    %s19 = sphi 0, %s17
    %s20 = sphi 0, %s18
    %s38 = sphi 0, %s40
    %s41 = sphi 0, %s38
    %s42 = sphi 0, %s41
    %s58 = sphi 0, %s42
    %s72 = sphi 0, %s74
    %s75 = sphi 0, %s72
    %s76 = sphi 0, %s75
    %s92 = sphi 0, %s76
    %s98 = sphi 0, %s100
    %s101 = sphi 0, %s98
    %s102 = sphi 0, %s101
    %s118 = sphi 0, %s102
  $region4: #{tpu_custom_call.1} parent=0 // loop_header_branch
    %11 = sbr.rel (%p9) target = $region8
  $region5: #{tpu_custom_call.1} parent=0 // loop_body
    %s13 = ssub.s32 %s8, 1
    %s14 = ssub.s32 %s8, 2
    %s21 = sadd.s32 1, %s16
    %p22 = scmp.ge.s32.totalorder %s21, 2
    %s23 = scalar_select %p22, 0, %s21
    %s24 = sadd.s32 1, %s15
    %s25 = scalar_select %p22, %s24, %s15
    %p26 = scmp.ge.s32.totalorder %s25, 2
    %s27 = scalar_select %p26, 0, %s25
    %s28 = smul.u32 %s15, 2
    %s29 = sadd.s32 %s28, %s16
    %p30 = scmp.lt.s32.totalorder %s29, 2
    %s31 = scalar_select %p30, %s29, 2
    %s32 = smul.u32 %s27, 2
    %s33 = sadd.s32 %s32, %s23
    %p34 = scmp.lt.s32.totalorder %s33, 2
    %s35 = scalar_select %p34, %s33, 2
    %s36 = ssub.s32 %s31, %s35
    %p37 = scmp.eq.s32.totalorder %s36, 0
    %s39 = sadd.s32 %s38, 1
    %s40 = scalar_select %p37, %s38, %s39
    %p43 = pneg %p37
    %p44 = scmp.eq.s32.totalorder %s8, 3
    %p45 = por %p43, %p44
    %p46 = scmp.ne.s32.totalorder %s38, %s41
    %p47 = scmp.eq.s32.totalorder %s8, 0
    %p48 = por %p46, %p47
    %p49 = scmp.ne.s32.totalorder %s38, %s41
    %p50 = scmp.eq.s32.totalorder %s13, 3
    %p51 = por %p49, %p50
    %p52 = scmp.ne.s32.totalorder %s41, %s42
    %p53 = scmp.eq.s32.totalorder %s13, 0
    %p54 = por %p52, %p53
    %p55 = scmp.ne.s32.totalorder %s41, %s42
    %p56 = scmp.eq.s32.totalorder %s14, 3
    %p57 = por %p55, %p56
    %p59 = scmp.ne.s32.totalorder %s42, %s58
    %p60 = scmp.eq.s32.totalorder %s14, 0
    %p61 = por %p59, %p60
    %s62 = smul.u32 %s15, 2
    %s63 = sadd.s32 %s62, %s16
    %p64 = scmp.lt.s32.totalorder %s63, 2
    %s65 = scalar_select %p64, %s63, 2
    %s66 = smul.u32 %s27, 2
    %s67 = sadd.s32 %s66, %s23
    %p68 = scmp.lt.s32.totalorder %s67, 2
    %s69 = scalar_select %p68, %s67, 2
    %s70 = ssub.s32 %s65, %s69
    %p71 = scmp.eq.s32.totalorder %s70, 0
    %s73 = sadd.s32 %s72, 1
    %s74 = scalar_select %p71, %s72, %s73
    %p77 = pneg %p71
    %p78 = scmp.eq.s32.totalorder %s8, 3
    %p79 = por %p77, %p78
    %p80 = scmp.ne.s32.totalorder %s72, %s75
    %p81 = scmp.eq.s32.totalorder %s8, 0
    %p82 = por %p80, %p81
    %p83 = scmp.ne.s32.totalorder %s72, %s75
    %p84 = scmp.eq.s32.totalorder %s13, 3
    %p85 = por %p83, %p84
    %p86 = scmp.ne.s32.totalorder %s75, %s76
    %p87 = scmp.eq.s32.totalorder %s13, 0
    %p88 = por %p86, %p87
    %p89 = scmp.ne.s32.totalorder %s75, %s76
    %p90 = scmp.eq.s32.totalorder %s14, 3
    %p91 = por %p89, %p90
    %p93 = scmp.ne.s32.totalorder %s76, %s92
    %p94 = scmp.eq.s32.totalorder %s14, 0
    %p95 = por %p93, %p94
    %s96 = ssub.s32 %s15, %s27
    %p97 = scmp.eq.s32.totalorder %s96, 0
    %s99 = sadd.s32 %s98, 1
    %s100 = scalar_select %p97, %s98, %s99
    %p103 = pneg %p97
    %p104 = scmp.eq.s32.totalorder %s8, 3
    %p105 = por %p103, %p104
    %p106 = scmp.ne.s32.totalorder %s98, %s101
    %p107 = scmp.eq.s32.totalorder %s8, 0
    %p108 = por %p106, %p107
    %p109 = scmp.ne.s32.totalorder %s98, %s101
    %p110 = scmp.eq.s32.totalorder %s13, 3
    %p111 = por %p109, %p110
    %p112 = scmp.ne.s32.totalorder %s101, %s102
    %p113 = scmp.eq.s32.totalorder %s13, 0
    %p114 = por %p112, %p113
    %p115 = scmp.ne.s32.totalorder %s101, %s102
    %p116 = scmp.eq.s32.totalorder %s14, 3
    %p117 = por %p115, %p116
    %p119 = scmp.ne.s32.totalorder %s102, %s118
    %p120 = scmp.eq.s32.totalorder %s14, 0
    %p121 = por %p119, %p120
    %p122 = scmp.le.s32.totalorder 1, %s8
    %p123 = scmp.lt.s32.totalorder %s8, 5
    %p124 = pnand %p122, %p123
    %p125 = pneg %p124
    // Predicated region
    $region9: #{tpu_custom_call.1} parent=5 // pred_check
      _
    $region10: #{tpu_custom_call.1} parent=5 // pred_check_branch
      %127 = sbr.rel (%p124) target = $region12
    $region11: #{tpu_custom_call.1} parent=5 // pred_region
      %s128 = ssub.s32 %s8, 1
    $region12: #{tpu_custom_call.1} parent=5 // pred_fallthru
      _
    %p129 = scmp.lt.s32.totalorder %s8, 4
    // Predicated region
    $region13: #{tpu_custom_call.1} parent=5 // pred_check
      %p130 = pneg %p129
    $region14: #{tpu_custom_call.1} parent=5 // pred_check_branch
      %132 = sbr.rel (%p130) target = $region16
    $region15: #{tpu_custom_call.1} parent=5 // pred_region
      // Predicated region
      $region17: #{tpu_custom_call.1} parent=15 // pred_check
        %p133 = pneg %p48
      $region18: #{tpu_custom_call.1} parent=15 // pred_check_branch
        %135 = sbr.rel (%p133) target = $region20
      $region19: #{tpu_custom_call.1} parent=15 // pred_region
        %s136 = smul.u32 %s15, 2
        %s137 = sadd.s32 %s136, %s16
        %p138 = scmp.lt.s32.totalorder %s137, 2
        %s139 = scalar_select %p138, %s137, 2
        %p140 = scmp.lt.s32.totalorder %s139, 2
        %s141 = scalar_select %p140, %s139, 2
        %s142 = smul.addr %s141, 8
        %s143 = scalar_lea.vmem %s0, %s142
        %s144 = smul.u32 %s15, 2
        %s145 = sadd.s32 %s144, %s16
        %p146 = scmp.lt.s32.totalorder %s145, 2
        %s147 = scalar_select %p146, %s145, 2
      $region20: #{tpu_custom_call.1} parent=15 // pred_fallthru
        _
      // Predicated region
      $region21: #{tpu_custom_call.1} parent=15 // pred_check
        %p148 = pneg %p82
      $region22: #{tpu_custom_call.1} parent=15 // pred_check_branch
        %150 = sbr.rel (%p148) target = $region24
      $region23: #{tpu_custom_call.1} parent=15 // pred_region
        %s151 = smul.u32 %s15, 2
        %s152 = sadd.s32 %s151, %s16
        %p153 = scmp.lt.s32.totalorder %s152, 2
        %s154 = scalar_select %p153, %s152, 2
        %p155 = scmp.lt.s32.totalorder %s154, 2
        %s156 = scalar_select %p155, %s154, 2
        %s157 = smul.addr %s156, 8
        %s158 = scalar_lea.vmem %s1, %s157
        %s159 = smul.u32 %s15, 2
        %s160 = sadd.s32 %s159, %s16
        %p161 = scmp.lt.s32.totalorder %s160, 2
        %s162 = scalar_select %p161, %s160, 2
      $region24: #{tpu_custom_call.1} parent=15 // pred_fallthru
        _
    $region16: #{tpu_custom_call.1} parent=5 // pred_fallthru
      _
    %p163 = scmp.le.s32.totalorder 1, %s8
    %p164 = scmp.lt.s32.totalorder %s8, 5
    %p165 = pnand %p163, %p164
    %p166 = pneg %p165
    // Predicated region
    $region25: #{tpu_custom_call.1} parent=5 // pred_check
      _
    $region26: #{tpu_custom_call.1} parent=5 // pred_check_branch
      %168 = sbr.rel (%p165) target = $region28
    $region27: #{tpu_custom_call.1} parent=5 // pred_region
      %s169 = ssub.s32 %s8, 1
      %s170 = smul.u32 %s17, 2
      %s171 = sadd.s32 %s170, %s18
      %p172 = scmp.lt.s32.totalorder %s171, 2
      %s173 = scalar_select %p172, %s171, 2
      %p174 = scmp.lt.s32.totalorder %s173, 2
      %s175 = scalar_select %p174, %s173, 2
      %s176 = smul.addr %s175, 8
      %s177 = scalar_lea.vmem %s0, %s176
      %p178 = pneg %p54
      %p179 = pneg %p51
      %s180 = smul.u32 %s17, 2
      %s181 = sadd.s32 %s180, %s18
      %p182 = scmp.lt.s32.totalorder %s181, 2
      %s183 = scalar_select %p182, %s181, 2
      %p184 = scmp.lt.s32.totalorder %s183, 2
      %s185 = scalar_select %p184, %s183, 2
      %s186 = smul.addr %s185, 8
      %s187 = scalar_lea.vmem %s1, %s186
      %p188 = pneg %p88
      %p189 = pneg %p85
      %p190 = pneg %p114
      %p191 = pneg %p111
      %p192 = scmp.lt.s32.totalorder %s17, 1
      %s193 = scalar_select %p192, %s17, 1
      %s194 = scalar_lea.vmem %s2, %s193
      %s195 = smul.u32 %s17, 2
      %s196 = sadd.s32 %s195, %s18
      %p197 = scmp.lt.s32.totalorder %s196, 2
      %s198 = scalar_select %p197, %s196, 2
      %p199 = scmp.lt.s32.totalorder %s198, 2
      %s200 = scalar_select %p199, %s198, 2
      %s201 = smul.addr %s200, 8
      %s202 = scalar_lea.vmem %s0, %s201
      %s203 = smul.u32 %s17, 2
      %s204 = sadd.s32 %s203, %s18
      %p205 = scmp.lt.s32.totalorder %s204, 2
      %s206 = scalar_select %p205, %s204, 2
      %s207 = smul.u32 %s17, 2
      %s208 = sadd.s32 %s207, %s18
      %p209 = scmp.lt.s32.totalorder %s208, 2
      %s210 = scalar_select %p209, %s208, 2
      %p211 = scmp.lt.s32.totalorder %s210, 2
      %s212 = scalar_select %p211, %s210, 2
      %s213 = smul.addr %s212, 8
      %s214 = scalar_lea.vmem %s1, %s213
      %s215 = smul.u32 %s17, 2
      %s216 = sadd.s32 %s215, %s18
      %p217 = scmp.lt.s32.totalorder %s216, 2
      %s218 = scalar_select %p217, %s216, 2
      %p219 = scmp.lt.s32.totalorder %s17, 1
      %s220 = scalar_select %p219, %s17, 1
      %s221 = scalar_lea.vmem %s2, %s220
      %p222 = scmp.eq.s32.totalorder %s18, 0
      // Predicated region
      $region29: #{tpu_custom_call.1} parent=27 // pred_check
        %p223 = pneg %p222
      $region30: #{tpu_custom_call.1} parent=27 // pred_check_branch
        %225 = sbr.rel (%p223) target = $region32
      $region31: #{tpu_custom_call.1} parent=27 // pred_region
        %vm226 = vcmask 0
        %227 = vst.msk [vmem:[%s221] sm:$0x1] %vm226, 0.0
      $region32: #{tpu_custom_call.1} parent=27 // pred_fallthru
        _
      %v228 = vld [vmem:[%s202] sm:$0xff]
      %v229 = vld [vmem:[%s214] sm:$0xff]
      %v230 = vlaneseq
      %v231 = vand.u32 %v230, 127
      %232 = vset.pattern.permute.xlu0 0
      %233 = vperm.xlu0 %232, %v229
      %v234 = vpop.permute.xlu0 %233
      %vm235 = vcmp.eq.s32.totalorder %v231, %v234
      %v236 = vsub.f32 %v228, 2.0
      %v237 = vsel %vm235, %v236, %v228
      %vm238 = vcmask 261120
      %v239 = vsel %vm238, %v237, -inf
      %240 = vmax.xlane.f32.xlu0 %v239
      %v241 = vpop.xlane.xlu0 %240
      %v242 = vsub.f32 %v237, %v241
      %v243 = vmul.f32 %v242, 1.442695
      %v244 = vpow.pop %v243
      %v245 = vsel %vm238, %v244, 0.0
      %246 = vadd.xlane.f32.xlu0 %v245
      %v247 = vpop.xlane.xlu0 %246
      %v248 = vlog2.pop %v247
      %v249 = vmul.f32 %v248, 0.6931472
      %v250 = vadd.f32 %v249, %v241
      %v251 = vsel %vm235, %v236, 0.0
      %v252 = vsel %vm238, %v251, 0.0
      %253 = vadd.xlane.f32.xlu0 %v252
      %v254 = vpop.xlane.xlu0 %253
      %v255 = vsub.f32 %v250, %v254
      %s256 = smul.u32 %s17, 2
      %s257 = sadd.s32 %s256, %s18
      %s258 = smul.u32 %s257, 8
      %v259 = vlaneseq
      %v260 = vshrl.u32 %v259, 7
      %v261 = vstv %s258
      %v262 = vadd.s32 %v260, %v261
      %vm263 = vcmp.lt.s32.totalorder %v262, 20
      %v264 = vsel %vm263, %v255, 0.0
      %v265 = vld [vmem:[%s221] sm:$0x1]
      %vm266 = vcmask 7168
      %v267 = vsel %vm266, %v264, 0.0
      %268 = vadd.xlane.f32.xlu0 %v267
      %v269 = vpop.xlane.xlu0 %268
      %v270 = vrot.slane %v269, 4
      %v271 = vadd.f32 %v269, %v270
      %v272 = vrot.slane %v271, 2
      %v273 = vadd.f32 %v271, %v272
      %v274 = vrot.slane %v273, 1
      %v275 = vadd.f32 %v273, %v274
      %s276 = vtos %v275
      %v277 = vstv %s276
      %v278 = vadd.f32 %v265, %v277
      %vm279 = vcmask 0
      %280 = vst.msk [vmem:[%s221] sm:$0x1] %vm279, %v278
      %p281 = scmp.lt.s32.totalorder %s17, 1
      %s282 = scalar_select %p281, %s17, 1
      %s283 = scalar_lea.vmem %s2, %s282
      // Predicated region
      $region33: #{tpu_custom_call.1} parent=27 // pred_check
        %p284 = pneg %p111
      $region34: #{tpu_custom_call.1} parent=27 // pred_check_branch
        %286 = sbr.rel (%p284) target = $region36
      $region35: #{tpu_custom_call.1} parent=27 // pred_region
        _
      $region36: #{tpu_custom_call.1} parent=27 // pred_fallthru
        _
    $region28: #{tpu_custom_call.1} parent=5 // pred_fallthru
      _
    %p287 = scmp.le.s32.totalorder 2, %s8
    // Predicated region
    $region37: #{tpu_custom_call.1} parent=5 // pred_check
      %p288 = pneg %p287
    $region38: #{tpu_custom_call.1} parent=5 // pred_check_branch
      %290 = sbr.rel (%p288) target = $region40
    $region39: #{tpu_custom_call.1} parent=5 // pred_region
      %s291 = ssub.s32 %s8, 2
      // Predicated region
      $region41: #{tpu_custom_call.1} parent=39 // pred_check
        %p292 = pneg %p117
      $region42: #{tpu_custom_call.1} parent=39 // pred_check_branch
        %294 = sbr.rel (%p292) target = $region44
      $region43: #{tpu_custom_call.1} parent=39 // pred_region
        %p295 = scmp.lt.s32.totalorder %s19, 1
        %s296 = scalar_select %p295, %s19, 1
        %s297 = scalar_lea.vmem %s2, %s296
      $region44: #{tpu_custom_call.1} parent=39 // pred_fallthru
        _
    $region40: #{tpu_custom_call.1} parent=5 // pred_fallthru
      _
  $region6: #{tpu_custom_call.1} parent=0 // loop_footer
    %s12 = sadd.s32 1, %s8
  $region7: #{tpu_custom_call.1} parent=0 // loop_footer_branch
    %7 = sbr.rel target = $region3
  $region8: #{tpu_custom_call.1} parent=0 // loop_exit
    _

</llo_original>
